<compile_context>
chip_gen: v6e
topology: v6e:2x2x1
jax: 0.10.0
libtpu: 0.0.40
codegen_flags: <defaults>
</compile_context>

<pallas_src>
import jax
import jax.numpy as jnp
from jax.experimental import pallas as pl
from jax.experimental.pallas import tpu as pltpu

# ---- constants from the PyTorch module ------------------------------------
N = 10
BATCH_SIZE = 32
INITIAL_INVENTORY = 3500.0
INITIAL_PRICE = 172.0
PERM_IMPACT = 2.5e-07
TEMP_IMPACT = 5e-06
HIDDEN = 32
LANES = 128  # one full 128-lane group of episodes per grid step


# ---- Pallas kernel ----------------------------------------------------------
def forward_pass_kernel(noise_ref, w1_ref, b1_ref, w2_ref, b2_ref, out_ref):
    # noise_ref: (1, N, LANES) VMEM   -- one 128-lane group of episodes
    # w1_ref: (HIDDEN, 2), b1_ref/w2_ref: (HIDDEN, 1) VMEM, b2_ref: (1,1) SMEM
    # out_ref: (1, 1, LANES) VMEM
    f32 = jnp.float32

    # lane-major per-episode state: (1, LANES)
    inventory = jnp.full((1, LANES), INITIAL_INVENTORY, f32)
    price = jnp.full((1, LANES), INITIAL_PRICE, f32)
    profit = jnp.zeros((1, LANES), f32)

    # hoisted loop-invariant weight slices / broadcasts (JAX does not CSE them)
    w1_time = w1_ref[:, 0:1]                                   # (H, 1)
    w1_inv = jnp.broadcast_to(w1_ref[:, 1:2], (HIDDEN, LANES)) # (H, LANES)
    b1_col = b1_ref[...]                                       # (H, 1)
    w2_b = jnp.broadcast_to(w2_ref[...], (HIDDEN, LANES))      # (H, LANES)
    b2 = b2_ref[0, 0]                                          # scalar (SMEM)
    inv_init_recip = 1.0 / INITIAL_INVENTORY

    # Fully unrolled (N is compile-time), mirroring the PyTorch loop with the
    # break at n == N - 1 (liquidation step).
    for n in range(N + 1):
        if n == N - 1:
            profit = profit + inventory * (price - TEMP_IMPACT * inventory)
            break

        time = n / N                                           # python scalar
        inv_norm = inventory * inv_init_recip                  # (1, LANES)

        # linear1 + tanh: time-dependent part is only (H, 1) work.
        bias_n = time * w1_time + b1_col                       # (H, 1)
        h = jnp.tanh(w1_inv * inv_norm + bias_n)               # (H, LANES)

        # linear2 as a sublane (XLU) reduction over HIDDEN, then tanh-sigmoid.
        logit = jnp.sum(h * w2_b, axis=0, keepdims=True) + b2  # (1, LANES)
        gate = 0.5 * (jnp.tanh(0.5 * logit) + 1.0)             # sigmoid

        action = gate * inventory                              # (1, LANES)
        profit = profit + action * (price - TEMP_IMPACT * action)
        price = price + noise_ref[0, n:n + 1, :] - PERM_IMPACT * action
        inventory = inventory - action
        # TODO(synk): the PyTorch module also records self.inventories /
        # self.prices as numpy side effects; only the returned tensor is
        # reproduced here.

    out_ref[0, :, :] = INITIAL_INVENTORY * INITIAL_PRICE - profit


# ---- packed (zero-plumbing) entry point -------------------------------------
def forward_pass_packed(noise_packed, w1, b1, w2, b2):
    """noise_packed: (G, N, 128) lane-major float32 (episode = g*128 + lane).
    Returns (G, 1, 128) float32."""
    G = noise_packed.shape[0]
    vmem = pltpu.MemorySpace.VMEM
    return pl.pallas_call(
        forward_pass_kernel,
        out_shape=jax.ShapeDtypeStruct((G, 1, LANES), jnp.float32),
        grid=(G,),
        in_specs=[
            pl.BlockSpec((1, N, LANES), lambda g: (g, 0, 0), memory_space=vmem),
            pl.BlockSpec((HIDDEN, 2), lambda g: (0, 0), memory_space=vmem),
            pl.BlockSpec((HIDDEN, 1), lambda g: (0, 0), memory_space=vmem),
            pl.BlockSpec((HIDDEN, 1), lambda g: (0, 0), memory_space=vmem),
            pl.BlockSpec(memory_space=pltpu.MemorySpace.SMEM),  # b2 scalar
        ],
        out_specs=pl.BlockSpec((1, 1, LANES), lambda g: (g, 0, 0),
                               memory_space=vmem),
        compiler_params=pltpu.CompilerParams(
            dimension_semantics=("parallel",)),
    )(noise_packed, w1, b1, w2, b2)


# ---- PyTorch-interface wrapper ----------------------------------------------
def forward_pass(noise, w1, b1, w2, b2):
    """noise: (B, N, 1) float32 (PyTorch layout).
    w1: (HIDDEN, 2), b1: (HIDDEN, 1), w2: (HIDDEN, 1), b2: (1, 1).
    Returns (B, 1) float32, matching the PyTorch module."""
    B = noise.shape[0]
    G = (B + LANES - 1) // LANES
    Bpad = G * LANES

    # lane-major noise: (N, B) -> pad lanes -> (G, N, 128)
    noise_nb = jnp.transpose(noise[:, :, 0]).astype(jnp.float32)  # (N, B)
    if Bpad != B:
        noise_nb = jnp.pad(noise_nb, ((0, 0), (0, Bpad - B)))
    noise_packed = noise_nb.reshape(N, G, LANES).transpose(1, 0, 2)

    out = forward_pass_packed(noise_packed,
                              w1.astype(jnp.float32), b1.astype(jnp.float32),
                              w2.astype(jnp.float32), b2.astype(jnp.float32))
    return out.reshape(Bpad)[:B].reshape(B, 1)


# ---- deterministic parameter init (PyTorch nn.Linear-style uniform) ---------
def init_policy_params(key):
    k1, k2, k3, k4 = jax.random.split(key, 4)
    bound1 = 1.0 / jnp.sqrt(2.0)            # fan_in = 2
    w1 = jax.random.uniform(k1, (HIDDEN, 2), jnp.float32, -bound1, bound1)
    b1 = jax.random.uniform(k2, (HIDDEN, 1), jnp.float32, -bound1, bound1)
    bound2 = 1.0 / jnp.sqrt(float(HIDDEN))  # fan_in = 32
    w2 = jax.random.uniform(k3, (HIDDEN, 1), jnp.float32, -bound2, bound2)
    b2 = jax.random.uniform(k4, (1, 1), jnp.float32, -bound2, bound2)
    return w1, b1, w2, b2


# ---- pure-JAX reference for correctness check -------------------------------
def forward_pass_ref(noise, w1, b1, w2, b2):
    B = noise.shape[0]
    inventory = jnp.full((B, 1), INITIAL_INVENTORY, jnp.float32)
    price = jnp.full((B, 1), INITIAL_PRICE, jnp.float32)
    profit = jnp.zeros((B, 1), jnp.float32)
    for n in range(N + 1):
        if n == N - 1:
            profit = profit + inventory * (price - TEMP_IMPACT * inventory)
            break
        time = jnp.full((B, 1), n / N, jnp.float32)
        state = jnp.concatenate([time, inventory / INITIAL_INVENTORY], axis=1)
        h = jnp.tanh(state @ w1.T + b1.T)          # (B, HIDDEN)
        gate = jax.nn.sigmoid(h @ w2 + b2)         # (B, 1)
        action = gate * inventory
        profit = profit + action * (price - TEMP_IMPACT * action)
        price = price + noise[:, n] - PERM_IMPACT * action
        inventory = inventory - action
    return INITIAL_INVENTORY * INITIAL_PRICE - profit


if __name__ == "__main__":
    key = jax.random.PRNGKey(0)
    k_noise, k_params, k_noise2 = jax.random.split(key, 3)
    w1, b1, w2, b2 = init_policy_params(k_params)

    # The result is (initial_inventory * initial_price) - profit, a small
    # difference of ~6e5-scale f32 numbers (1 ulp ~ 0.036), so use a tolerance
    # relative to that scale.
    tol = 1e-5 * INITIAL_INVENTORY * INITIAL_PRICE  # ~6.0

    # Test 1: module's native batch (B=32 -> one padded 128-lane group, G=1).
    noise = jax.random.normal(k_noise, (BATCH_SIZE, N, 1), jnp.float32) * 0.5
    out = jax.block_until_ready(forward_pass(noise, w1, b1, w2, b2))
    ref = forward_pass_ref(noise, w1, b1, w2, b2)
    assert out.shape == (BATCH_SIZE, 1)
    max_err = jnp.max(jnp.abs(out - ref))
    assert max_err <= tol, ("B=32", max_err)

    # Test 2: multi-group batch exercising the grid path (B=256 -> G=2).
    B2 = 2 * LANES
    noise2 = jax.random.normal(k_noise2, (B2, N, 1), jnp.float32) * 0.5
    out2 = jax.block_until_ready(forward_pass(noise2, w1, b1, w2, b2))
    ref2 = forward_pass_ref(noise2, w1, b1, w2, b2)
    assert out2.shape == (B2, 1)
    max_err2 = jnp.max(jnp.abs(out2 - ref2))
    assert max_err2 <= tol, ("B=256", max_err2)

    print("KERNEL_OK")
</pallas_src>

<mosaic_0001>
module attributes {stable_mosaic.version = 11 : i64} {
  func.func @forward_pass_kernel(%arg0: i32, %arg1: memref<1x10x128xf32, #tpu.memory_space<vmem>>, %arg2: memref<32x2xf32, #tpu.memory_space<vmem>>, %arg3: memref<32x1xf32, #tpu.memory_space<vmem>>, %arg4: memref<32x1xf32, #tpu.memory_space<vmem>>, %arg5: memref<1x1xf32, #tpu.memory_space<smem>>, %arg6: memref<1x1x128xf32, #tpu.memory_space<vmem>>) attributes {dimension_semantics = [#tpu.dimension_semantics<parallel>], iteration_bounds = array<i64: 1>, scalar_prefetch = 0 : i64, scratch_operands = 0 : i64, tpu.core_type = #tpu.core_type<tc>, window_params = [{transform_indices = @transform_0, window_bounds = array<i64: 1, 10, 128>}, {pipeline_mode = #tpu.pipeline_mode<synchronous>, transform_indices = @transform_1, window_bounds = array<i64: 32, 2>}, {pipeline_mode = #tpu.pipeline_mode<synchronous>, transform_indices = @transform_2, window_bounds = array<i64: 32, 1>}, {pipeline_mode = #tpu.pipeline_mode<synchronous>, transform_indices = @transform_3, window_bounds = array<i64: 32, 1>}, {transform_indices = @transform_4, window_bounds = array<i64: 1, 1>}, {transform_indices = @transform_5, window_bounds = array<i64: 1, 1, 128>}]} {
    %cst = arith.constant 3.500000e+03 : f32
    %0 = vector.broadcast %cst : f32 to vector<1x128xf32>
    %cst_0 = arith.constant 1.720000e+02 : f32
    %1 = vector.broadcast %cst_0 : f32 to vector<1x128xf32>
    %cst_1 = arith.constant 0.000000e+00 : f32
    %2 = vector.broadcast %cst_1 : f32 to vector<1x128xf32>
    %c0 = arith.constant 0 : index
    %c0_2 = arith.constant 0 : index
    %3 = vector.load %arg2[%c0, %c0_2] : memref<32x2xf32, #tpu.memory_space<vmem>>, vector<32x1xf32>
    %c0_3 = arith.constant 0 : index
    %c1 = arith.constant 1 : index
    %4 = vector.load %arg2[%c0_3, %c1] : memref<32x2xf32, #tpu.memory_space<vmem>>, vector<32x1xf32>
    %5 = vector.shape_cast %4 : vector<32x1xf32> to vector<32x1xf32>
    %6 = vector.broadcast %5 : vector<32x1xf32> to vector<32x128xf32>
    %c0_4 = arith.constant 0 : index
    %c0_5 = arith.constant 0 : index
    %7 = vector.load %arg3[%c0_4, %c0_5] : memref<32x1xf32, #tpu.memory_space<vmem>>, vector<32x1xf32>
    %c0_6 = arith.constant 0 : index
    %c0_7 = arith.constant 0 : index
    %8 = vector.load %arg4[%c0_6, %c0_7] : memref<32x1xf32, #tpu.memory_space<vmem>>, vector<32x1xf32>
    %9 = vector.shape_cast %8 : vector<32x1xf32> to vector<32x1xf32>
    %10 = vector.broadcast %9 : vector<32x1xf32> to vector<32x128xf32>
    %c0_8 = arith.constant 0 : index
    %c0_9 = arith.constant 0 : index
    %11 = memref.load %arg5[%c0_8, %c0_9] : memref<1x1xf32, #tpu.memory_space<smem>>
    %cst_10 = arith.constant 2.85714283E-4 : f32
    %12 = vector.broadcast %cst_10 : f32 to vector<1x128xf32>
    %13 = arith.mulf %0, %12 : vector<1x128xf32>
    %cst_11 = arith.constant 0.000000e+00 : f32
    %14 = vector.broadcast %cst_11 : f32 to vector<32x1xf32>
    %15 = arith.mulf %14, %3 : vector<32x1xf32>
    %16 = arith.addf %15, %7 : vector<32x1xf32>
    %17 = vector.broadcast %13 : vector<1x128xf32> to vector<32x128xf32>
    %18 = arith.mulf %6, %17 : vector<32x128xf32>
    %19 = vector.broadcast %16 : vector<32x1xf32> to vector<32x128xf32>
    %20 = arith.addf %18, %19 : vector<32x128xf32>
    %21 = math.tanh %20 : vector<32x128xf32>
    %22 = arith.mulf %21, %10 : vector<32x128xf32>
    %cst_12 = arith.constant dense<0.000000e+00> : vector<128xf32>
    %23 = vector.multi_reduction <add>, %22, %cst_12 [0] : vector<32x128xf32> to vector<128xf32>
    %24 = vector.shape_cast %23 : vector<128xf32> to vector<1x128xf32>
    %25 = vector.broadcast %11 : f32 to vector<1x128xf32>
    %26 = arith.addf %24, %25 : vector<1x128xf32>
    %cst_13 = arith.constant 5.000000e-01 : f32
    %27 = vector.broadcast %cst_13 : f32 to vector<1x128xf32>
    %28 = arith.mulf %27, %26 : vector<1x128xf32>
    %29 = math.tanh %28 : vector<1x128xf32>
    %cst_14 = arith.constant 1.000000e+00 : f32
    %30 = vector.broadcast %cst_14 : f32 to vector<1x128xf32>
    %31 = arith.addf %29, %30 : vector<1x128xf32>
    %cst_15 = arith.constant 5.000000e-01 : f32
    %32 = vector.broadcast %cst_15 : f32 to vector<1x128xf32>
    %33 = arith.mulf %32, %31 : vector<1x128xf32>
    %34 = arith.mulf %33, %0 : vector<1x128xf32>
    %cst_16 = arith.constant 5.000000e-06 : f32
    %35 = vector.broadcast %cst_16 : f32 to vector<1x128xf32>
    %36 = arith.mulf %35, %34 : vector<1x128xf32>
    %37 = arith.subf %1, %36 : vector<1x128xf32>
    %38 = arith.mulf %34, %37 : vector<1x128xf32>
    %39 = arith.addf %2, %38 : vector<1x128xf32>
    %c0_17 = arith.constant 0 : index
    %c0_18 = arith.constant 0 : index
    %c0_19 = arith.constant 0 : index
    %40 = vector.load %arg1[%c0_17, %c0_18, %c0_19] : memref<1x10x128xf32, #tpu.memory_space<vmem>>, vector<1x1x128xf32>
    %41 = vector.shape_cast %40 : vector<1x1x128xf32> to vector<1x128xf32>
    %42 = arith.addf %1, %41 : vector<1x128xf32>
    %cst_20 = arith.constant 2.500000e-07 : f32
    %43 = vector.broadcast %cst_20 : f32 to vector<1x128xf32>
    %44 = arith.mulf %43, %34 : vector<1x128xf32>
    %45 = arith.subf %42, %44 : vector<1x128xf32>
    %46 = arith.subf %0, %34 : vector<1x128xf32>
    %cst_21 = arith.constant 2.85714283E-4 : f32
    %47 = vector.broadcast %cst_21 : f32 to vector<1x128xf32>
    %48 = arith.mulf %46, %47 : vector<1x128xf32>
    %cst_22 = arith.constant 1.000000e-01 : f32
    %49 = vector.broadcast %cst_22 : f32 to vector<32x1xf32>
    %50 = arith.mulf %49, %3 : vector<32x1xf32>
    %51 = arith.addf %50, %7 : vector<32x1xf32>
    %52 = vector.broadcast %48 : vector<1x128xf32> to vector<32x128xf32>
    %53 = arith.mulf %6, %52 : vector<32x128xf32>
    %54 = vector.broadcast %51 : vector<32x1xf32> to vector<32x128xf32>
    %55 = arith.addf %53, %54 : vector<32x128xf32>
    %56 = math.tanh %55 : vector<32x128xf32>
    %57 = arith.mulf %56, %10 : vector<32x128xf32>
    %cst_23 = arith.constant dense<0.000000e+00> : vector<128xf32>
    %58 = vector.multi_reduction <add>, %57, %cst_23 [0] : vector<32x128xf32> to vector<128xf32>
    %59 = vector.shape_cast %58 : vector<128xf32> to vector<1x128xf32>
    %60 = vector.broadcast %11 : f32 to vector<1x128xf32>
    %61 = arith.addf %59, %60 : vector<1x128xf32>
    %cst_24 = arith.constant 5.000000e-01 : f32
    %62 = vector.broadcast %cst_24 : f32 to vector<1x128xf32>
    %63 = arith.mulf %62, %61 : vector<1x128xf32>
    %64 = math.tanh %63 : vector<1x128xf32>
    %cst_25 = arith.constant 1.000000e+00 : f32
    %65 = vector.broadcast %cst_25 : f32 to vector<1x128xf32>
    %66 = arith.addf %64, %65 : vector<1x128xf32>
    %cst_26 = arith.constant 5.000000e-01 : f32
    %67 = vector.broadcast %cst_26 : f32 to vector<1x128xf32>
    %68 = arith.mulf %67, %66 : vector<1x128xf32>
    %69 = arith.mulf %68, %46 : vector<1x128xf32>
    %cst_27 = arith.constant 5.000000e-06 : f32
    %70 = vector.broadcast %cst_27 : f32 to vector<1x128xf32>
    %71 = arith.mulf %70, %69 : vector<1x128xf32>
    %72 = arith.subf %45, %71 : vector<1x128xf32>
    %73 = arith.mulf %69, %72 : vector<1x128xf32>
    %74 = arith.addf %39, %73 : vector<1x128xf32>
    %c0_28 = arith.constant 0 : index
    %c1_29 = arith.constant 1 : index
    %c0_30 = arith.constant 0 : index
    %75 = vector.load %arg1[%c0_28, %c1_29, %c0_30] : memref<1x10x128xf32, #tpu.memory_space<vmem>>, vector<1x1x128xf32>
    %76 = vector.shape_cast %75 : vector<1x1x128xf32> to vector<1x128xf32>
    %77 = arith.addf %45, %76 : vector<1x128xf32>
    %cst_31 = arith.constant 2.500000e-07 : f32
    %78 = vector.broadcast %cst_31 : f32 to vector<1x128xf32>
    %79 = arith.mulf %78, %69 : vector<1x128xf32>
    %80 = arith.subf %77, %79 : vector<1x128xf32>
    %81 = arith.subf %46, %69 : vector<1x128xf32>
    %cst_32 = arith.constant 2.85714283E-4 : f32
    %82 = vector.broadcast %cst_32 : f32 to vector<1x128xf32>
    %83 = arith.mulf %81, %82 : vector<1x128xf32>
    %cst_33 = arith.constant 2.000000e-01 : f32
    %84 = vector.broadcast %cst_33 : f32 to vector<32x1xf32>
    %85 = arith.mulf %84, %3 : vector<32x1xf32>
    %86 = arith.addf %85, %7 : vector<32x1xf32>
    %87 = vector.broadcast %83 : vector<1x128xf32> to vector<32x128xf32>
    %88 = arith.mulf %6, %87 : vector<32x128xf32>
    %89 = vector.broadcast %86 : vector<32x1xf32> to vector<32x128xf32>
    %90 = arith.addf %88, %89 : vector<32x128xf32>
    %91 = math.tanh %90 : vector<32x128xf32>
    %92 = arith.mulf %91, %10 : vector<32x128xf32>
    %cst_34 = arith.constant dense<0.000000e+00> : vector<128xf32>
    %93 = vector.multi_reduction <add>, %92, %cst_34 [0] : vector<32x128xf32> to vector<128xf32>
    %94 = vector.shape_cast %93 : vector<128xf32> to vector<1x128xf32>
    %95 = vector.broadcast %11 : f32 to vector<1x128xf32>
    %96 = arith.addf %94, %95 : vector<1x128xf32>
    %cst_35 = arith.constant 5.000000e-01 : f32
    %97 = vector.broadcast %cst_35 : f32 to vector<1x128xf32>
    %98 = arith.mulf %97, %96 : vector<1x128xf32>
    %99 = math.tanh %98 : vector<1x128xf32>
    %cst_36 = arith.constant 1.000000e+00 : f32
    %100 = vector.broadcast %cst_36 : f32 to vector<1x128xf32>
    %101 = arith.addf %99, %100 : vector<1x128xf32>
    %cst_37 = arith.constant 5.000000e-01 : f32
    %102 = vector.broadcast %cst_37 : f32 to vector<1x128xf32>
    %103 = arith.mulf %102, %101 : vector<1x128xf32>
    %104 = arith.mulf %103, %81 : vector<1x128xf32>
    %cst_38 = arith.constant 5.000000e-06 : f32
    %105 = vector.broadcast %cst_38 : f32 to vector<1x128xf32>
    %106 = arith.mulf %105, %104 : vector<1x128xf32>
    %107 = arith.subf %80, %106 : vector<1x128xf32>
    %108 = arith.mulf %104, %107 : vector<1x128xf32>
    %109 = arith.addf %74, %108 : vector<1x128xf32>
    %c0_39 = arith.constant 0 : index
    %c2 = arith.constant 2 : index
    %c0_40 = arith.constant 0 : index
    %110 = vector.load %arg1[%c0_39, %c2, %c0_40] : memref<1x10x128xf32, #tpu.memory_space<vmem>>, vector<1x1x128xf32>
    %111 = vector.shape_cast %110 : vector<1x1x128xf32> to vector<1x128xf32>
    %112 = arith.addf %80, %111 : vector<1x128xf32>
    %cst_41 = arith.constant 2.500000e-07 : f32
    %113 = vector.broadcast %cst_41 : f32 to vector<1x128xf32>
    %114 = arith.mulf %113, %104 : vector<1x128xf32>
    %115 = arith.subf %112, %114 : vector<1x128xf32>
    %116 = arith.subf %81, %104 : vector<1x128xf32>
    %cst_42 = arith.constant 2.85714283E-4 : f32
    %117 = vector.broadcast %cst_42 : f32 to vector<1x128xf32>
    %118 = arith.mulf %116, %117 : vector<1x128xf32>
    %cst_43 = arith.constant 3.000000e-01 : f32
    %119 = vector.broadcast %cst_43 : f32 to vector<32x1xf32>
    %120 = arith.mulf %119, %3 : vector<32x1xf32>
    %121 = arith.addf %120, %7 : vector<32x1xf32>
    %122 = vector.broadcast %118 : vector<1x128xf32> to vector<32x128xf32>
    %123 = arith.mulf %6, %122 : vector<32x128xf32>
    %124 = vector.broadcast %121 : vector<32x1xf32> to vector<32x128xf32>
    %125 = arith.addf %123, %124 : vector<32x128xf32>
    %126 = math.tanh %125 : vector<32x128xf32>
    %127 = arith.mulf %126, %10 : vector<32x128xf32>
    %cst_44 = arith.constant dense<0.000000e+00> : vector<128xf32>
    %128 = vector.multi_reduction <add>, %127, %cst_44 [0] : vector<32x128xf32> to vector<128xf32>
    %129 = vector.shape_cast %128 : vector<128xf32> to vector<1x128xf32>
    %130 = vector.broadcast %11 : f32 to vector<1x128xf32>
    %131 = arith.addf %129, %130 : vector<1x128xf32>
    %cst_45 = arith.constant 5.000000e-01 : f32
    %132 = vector.broadcast %cst_45 : f32 to vector<1x128xf32>
    %133 = arith.mulf %132, %131 : vector<1x128xf32>
    %134 = math.tanh %133 : vector<1x128xf32>
    %cst_46 = arith.constant 1.000000e+00 : f32
    %135 = vector.broadcast %cst_46 : f32 to vector<1x128xf32>
    %136 = arith.addf %134, %135 : vector<1x128xf32>
    %cst_47 = arith.constant 5.000000e-01 : f32
    %137 = vector.broadcast %cst_47 : f32 to vector<1x128xf32>
    %138 = arith.mulf %137, %136 : vector<1x128xf32>
    %139 = arith.mulf %138, %116 : vector<1x128xf32>
    %cst_48 = arith.constant 5.000000e-06 : f32
    %140 = vector.broadcast %cst_48 : f32 to vector<1x128xf32>
    %141 = arith.mulf %140, %139 : vector<1x128xf32>
    %142 = arith.subf %115, %141 : vector<1x128xf32>
    %143 = arith.mulf %139, %142 : vector<1x128xf32>
    %144 = arith.addf %109, %143 : vector<1x128xf32>
    %c0_49 = arith.constant 0 : index
    %c3 = arith.constant 3 : index
    %c0_50 = arith.constant 0 : index
    %145 = vector.load %arg1[%c0_49, %c3, %c0_50] : memref<1x10x128xf32, #tpu.memory_space<vmem>>, vector<1x1x128xf32>
    %146 = vector.shape_cast %145 : vector<1x1x128xf32> to vector<1x128xf32>
    %147 = arith.addf %115, %146 : vector<1x128xf32>
    %cst_51 = arith.constant 2.500000e-07 : f32
    %148 = vector.broadcast %cst_51 : f32 to vector<1x128xf32>
    %149 = arith.mulf %148, %139 : vector<1x128xf32>
    %150 = arith.subf %147, %149 : vector<1x128xf32>
    %151 = arith.subf %116, %139 : vector<1x128xf32>
    %cst_52 = arith.constant 2.85714283E-4 : f32
    %152 = vector.broadcast %cst_52 : f32 to vector<1x128xf32>
    %153 = arith.mulf %151, %152 : vector<1x128xf32>
    %cst_53 = arith.constant 4.000000e-01 : f32
    %154 = vector.broadcast %cst_53 : f32 to vector<32x1xf32>
    %155 = arith.mulf %154, %3 : vector<32x1xf32>
    %156 = arith.addf %155, %7 : vector<32x1xf32>
    %157 = vector.broadcast %153 : vector<1x128xf32> to vector<32x128xf32>
    %158 = arith.mulf %6, %157 : vector<32x128xf32>
    %159 = vector.broadcast %156 : vector<32x1xf32> to vector<32x128xf32>
    %160 = arith.addf %158, %159 : vector<32x128xf32>
    %161 = math.tanh %160 : vector<32x128xf32>
    %162 = arith.mulf %161, %10 : vector<32x128xf32>
    %cst_54 = arith.constant dense<0.000000e+00> : vector<128xf32>
    %163 = vector.multi_reduction <add>, %162, %cst_54 [0] : vector<32x128xf32> to vector<128xf32>
    %164 = vector.shape_cast %163 : vector<128xf32> to vector<1x128xf32>
    %165 = vector.broadcast %11 : f32 to vector<1x128xf32>
    %166 = arith.addf %164, %165 : vector<1x128xf32>
    %cst_55 = arith.constant 5.000000e-01 : f32
    %167 = vector.broadcast %cst_55 : f32 to vector<1x128xf32>
    %168 = arith.mulf %167, %166 : vector<1x128xf32>
    %169 = math.tanh %168 : vector<1x128xf32>
    %cst_56 = arith.constant 1.000000e+00 : f32
    %170 = vector.broadcast %cst_56 : f32 to vector<1x128xf32>
    %171 = arith.addf %169, %170 : vector<1x128xf32>
    %cst_57 = arith.constant 5.000000e-01 : f32
    %172 = vector.broadcast %cst_57 : f32 to vector<1x128xf32>
    %173 = arith.mulf %172, %171 : vector<1x128xf32>
    %174 = arith.mulf %173, %151 : vector<1x128xf32>
    %cst_58 = arith.constant 5.000000e-06 : f32
    %175 = vector.broadcast %cst_58 : f32 to vector<1x128xf32>
    %176 = arith.mulf %175, %174 : vector<1x128xf32>
    %177 = arith.subf %150, %176 : vector<1x128xf32>
    %178 = arith.mulf %174, %177 : vector<1x128xf32>
    %179 = arith.addf %144, %178 : vector<1x128xf32>
    %c0_59 = arith.constant 0 : index
    %c4 = arith.constant 4 : index
    %c0_60 = arith.constant 0 : index
    %180 = vector.load %arg1[%c0_59, %c4, %c0_60] : memref<1x10x128xf32, #tpu.memory_space<vmem>>, vector<1x1x128xf32>
    %181 = vector.shape_cast %180 : vector<1x1x128xf32> to vector<1x128xf32>
    %182 = arith.addf %150, %181 : vector<1x128xf32>
    %cst_61 = arith.constant 2.500000e-07 : f32
    %183 = vector.broadcast %cst_61 : f32 to vector<1x128xf32>
    %184 = arith.mulf %183, %174 : vector<1x128xf32>
    %185 = arith.subf %182, %184 : vector<1x128xf32>
    %186 = arith.subf %151, %174 : vector<1x128xf32>
    %cst_62 = arith.constant 2.85714283E-4 : f32
    %187 = vector.broadcast %cst_62 : f32 to vector<1x128xf32>
    %188 = arith.mulf %186, %187 : vector<1x128xf32>
    %cst_63 = arith.constant 5.000000e-01 : f32
    %189 = vector.broadcast %cst_63 : f32 to vector<32x1xf32>
    %190 = arith.mulf %189, %3 : vector<32x1xf32>
    %191 = arith.addf %190, %7 : vector<32x1xf32>
    %192 = vector.broadcast %188 : vector<1x128xf32> to vector<32x128xf32>
    %193 = arith.mulf %6, %192 : vector<32x128xf32>
    %194 = vector.broadcast %191 : vector<32x1xf32> to vector<32x128xf32>
    %195 = arith.addf %193, %194 : vector<32x128xf32>
    %196 = math.tanh %195 : vector<32x128xf32>
    %197 = arith.mulf %196, %10 : vector<32x128xf32>
    %cst_64 = arith.constant dense<0.000000e+00> : vector<128xf32>
    %198 = vector.multi_reduction <add>, %197, %cst_64 [0] : vector<32x128xf32> to vector<128xf32>
    %199 = vector.shape_cast %198 : vector<128xf32> to vector<1x128xf32>
    %200 = vector.broadcast %11 : f32 to vector<1x128xf32>
    %201 = arith.addf %199, %200 : vector<1x128xf32>
    %cst_65 = arith.constant 5.000000e-01 : f32
    %202 = vector.broadcast %cst_65 : f32 to vector<1x128xf32>
    %203 = arith.mulf %202, %201 : vector<1x128xf32>
    %204 = math.tanh %203 : vector<1x128xf32>
    %cst_66 = arith.constant 1.000000e+00 : f32
    %205 = vector.broadcast %cst_66 : f32 to vector<1x128xf32>
    %206 = arith.addf %204, %205 : vector<1x128xf32>
    %cst_67 = arith.constant 5.000000e-01 : f32
    %207 = vector.broadcast %cst_67 : f32 to vector<1x128xf32>
    %208 = arith.mulf %207, %206 : vector<1x128xf32>
    %209 = arith.mulf %208, %186 : vector<1x128xf32>
    %cst_68 = arith.constant 5.000000e-06 : f32
    %210 = vector.broadcast %cst_68 : f32 to vector<1x128xf32>
    %211 = arith.mulf %210, %209 : vector<1x128xf32>
    %212 = arith.subf %185, %211 : vector<1x128xf32>
    %213 = arith.mulf %209, %212 : vector<1x128xf32>
    %214 = arith.addf %179, %213 : vector<1x128xf32>
    %c0_69 = arith.constant 0 : index
    %c5 = arith.constant 5 : index
    %c0_70 = arith.constant 0 : index
    %215 = vector.load %arg1[%c0_69, %c5, %c0_70] : memref<1x10x128xf32, #tpu.memory_space<vmem>>, vector<1x1x128xf32>
    %216 = vector.shape_cast %215 : vector<1x1x128xf32> to vector<1x128xf32>
    %217 = arith.addf %185, %216 : vector<1x128xf32>
    %cst_71 = arith.constant 2.500000e-07 : f32
    %218 = vector.broadcast %cst_71 : f32 to vector<1x128xf32>
    %219 = arith.mulf %218, %209 : vector<1x128xf32>
    %220 = arith.subf %217, %219 : vector<1x128xf32>
    %221 = arith.subf %186, %209 : vector<1x128xf32>
    %cst_72 = arith.constant 2.85714283E-4 : f32
    %222 = vector.broadcast %cst_72 : f32 to vector<1x128xf32>
    %223 = arith.mulf %221, %222 : vector<1x128xf32>
    %cst_73 = arith.constant 6.000000e-01 : f32
    %224 = vector.broadcast %cst_73 : f32 to vector<32x1xf32>
    %225 = arith.mulf %224, %3 : vector<32x1xf32>
    %226 = arith.addf %225, %7 : vector<32x1xf32>
    %227 = vector.broadcast %223 : vector<1x128xf32> to vector<32x128xf32>
    %228 = arith.mulf %6, %227 : vector<32x128xf32>
    %229 = vector.broadcast %226 : vector<32x1xf32> to vector<32x128xf32>
    %230 = arith.addf %228, %229 : vector<32x128xf32>
    %231 = math.tanh %230 : vector<32x128xf32>
    %232 = arith.mulf %231, %10 : vector<32x128xf32>
    %cst_74 = arith.constant dense<0.000000e+00> : vector<128xf32>
    %233 = vector.multi_reduction <add>, %232, %cst_74 [0] : vector<32x128xf32> to vector<128xf32>
    %234 = vector.shape_cast %233 : vector<128xf32> to vector<1x128xf32>
    %235 = vector.broadcast %11 : f32 to vector<1x128xf32>
    %236 = arith.addf %234, %235 : vector<1x128xf32>
    %cst_75 = arith.constant 5.000000e-01 : f32
    %237 = vector.broadcast %cst_75 : f32 to vector<1x128xf32>
    %238 = arith.mulf %237, %236 : vector<1x128xf32>
    %239 = math.tanh %238 : vector<1x128xf32>
    %cst_76 = arith.constant 1.000000e+00 : f32
    %240 = vector.broadcast %cst_76 : f32 to vector<1x128xf32>
    %241 = arith.addf %239, %240 : vector<1x128xf32>
    %cst_77 = arith.constant 5.000000e-01 : f32
    %242 = vector.broadcast %cst_77 : f32 to vector<1x128xf32>
    %243 = arith.mulf %242, %241 : vector<1x128xf32>
    %244 = arith.mulf %243, %221 : vector<1x128xf32>
    %cst_78 = arith.constant 5.000000e-06 : f32
    %245 = vector.broadcast %cst_78 : f32 to vector<1x128xf32>
    %246 = arith.mulf %245, %244 : vector<1x128xf32>
    %247 = arith.subf %220, %246 : vector<1x128xf32>
    %248 = arith.mulf %244, %247 : vector<1x128xf32>
    %249 = arith.addf %214, %248 : vector<1x128xf32>
    %c0_79 = arith.constant 0 : index
    %c6 = arith.constant 6 : index
    %c0_80 = arith.constant 0 : index
    %250 = vector.load %arg1[%c0_79, %c6, %c0_80] : memref<1x10x128xf32, #tpu.memory_space<vmem>>, vector<1x1x128xf32>
    %251 = vector.shape_cast %250 : vector<1x1x128xf32> to vector<1x128xf32>
    %252 = arith.addf %220, %251 : vector<1x128xf32>
    %cst_81 = arith.constant 2.500000e-07 : f32
    %253 = vector.broadcast %cst_81 : f32 to vector<1x128xf32>
    %254 = arith.mulf %253, %244 : vector<1x128xf32>
    %255 = arith.subf %252, %254 : vector<1x128xf32>
    %256 = arith.subf %221, %244 : vector<1x128xf32>
    %cst_82 = arith.constant 2.85714283E-4 : f32
    %257 = vector.broadcast %cst_82 : f32 to vector<1x128xf32>
    %258 = arith.mulf %256, %257 : vector<1x128xf32>
    %cst_83 = arith.constant 0.699999988 : f32
    %259 = vector.broadcast %cst_83 : f32 to vector<32x1xf32>
    %260 = arith.mulf %259, %3 : vector<32x1xf32>
    %261 = arith.addf %260, %7 : vector<32x1xf32>
    %262 = vector.broadcast %258 : vector<1x128xf32> to vector<32x128xf32>
    %263 = arith.mulf %6, %262 : vector<32x128xf32>
    %264 = vector.broadcast %261 : vector<32x1xf32> to vector<32x128xf32>
    %265 = arith.addf %263, %264 : vector<32x128xf32>
    %266 = math.tanh %265 : vector<32x128xf32>
    %267 = arith.mulf %266, %10 : vector<32x128xf32>
    %cst_84 = arith.constant dense<0.000000e+00> : vector<128xf32>
    %268 = vector.multi_reduction <add>, %267, %cst_84 [0] : vector<32x128xf32> to vector<128xf32>
    %269 = vector.shape_cast %268 : vector<128xf32> to vector<1x128xf32>
    %270 = vector.broadcast %11 : f32 to vector<1x128xf32>
    %271 = arith.addf %269, %270 : vector<1x128xf32>
    %cst_85 = arith.constant 5.000000e-01 : f32
    %272 = vector.broadcast %cst_85 : f32 to vector<1x128xf32>
    %273 = arith.mulf %272, %271 : vector<1x128xf32>
    %274 = math.tanh %273 : vector<1x128xf32>
    %cst_86 = arith.constant 1.000000e+00 : f32
    %275 = vector.broadcast %cst_86 : f32 to vector<1x128xf32>
    %276 = arith.addf %274, %275 : vector<1x128xf32>
    %cst_87 = arith.constant 5.000000e-01 : f32
    %277 = vector.broadcast %cst_87 : f32 to vector<1x128xf32>
    %278 = arith.mulf %277, %276 : vector<1x128xf32>
    %279 = arith.mulf %278, %256 : vector<1x128xf32>
    %cst_88 = arith.constant 5.000000e-06 : f32
    %280 = vector.broadcast %cst_88 : f32 to vector<1x128xf32>
    %281 = arith.mulf %280, %279 : vector<1x128xf32>
    %282 = arith.subf %255, %281 : vector<1x128xf32>
    %283 = arith.mulf %279, %282 : vector<1x128xf32>
    %284 = arith.addf %249, %283 : vector<1x128xf32>
    %c0_89 = arith.constant 0 : index
    %c7 = arith.constant 7 : index
    %c0_90 = arith.constant 0 : index
    %285 = vector.load %arg1[%c0_89, %c7, %c0_90] : memref<1x10x128xf32, #tpu.memory_space<vmem>>, vector<1x1x128xf32>
    %286 = vector.shape_cast %285 : vector<1x1x128xf32> to vector<1x128xf32>
    %287 = arith.addf %255, %286 : vector<1x128xf32>
    %cst_91 = arith.constant 2.500000e-07 : f32
    %288 = vector.broadcast %cst_91 : f32 to vector<1x128xf32>
    %289 = arith.mulf %288, %279 : vector<1x128xf32>
    %290 = arith.subf %287, %289 : vector<1x128xf32>
    %291 = arith.subf %256, %279 : vector<1x128xf32>
    %cst_92 = arith.constant 2.85714283E-4 : f32
    %292 = vector.broadcast %cst_92 : f32 to vector<1x128xf32>
    %293 = arith.mulf %291, %292 : vector<1x128xf32>
    %cst_93 = arith.constant 8.000000e-01 : f32
    %294 = vector.broadcast %cst_93 : f32 to vector<32x1xf32>
    %295 = arith.mulf %294, %3 : vector<32x1xf32>
    %296 = arith.addf %295, %7 : vector<32x1xf32>
    %297 = vector.broadcast %293 : vector<1x128xf32> to vector<32x128xf32>
    %298 = arith.mulf %6, %297 : vector<32x128xf32>
    %299 = vector.broadcast %296 : vector<32x1xf32> to vector<32x128xf32>
    %300 = arith.addf %298, %299 : vector<32x128xf32>
    %301 = math.tanh %300 : vector<32x128xf32>
    %302 = arith.mulf %301, %10 : vector<32x128xf32>
    %cst_94 = arith.constant dense<0.000000e+00> : vector<128xf32>
    %303 = vector.multi_reduction <add>, %302, %cst_94 [0] : vector<32x128xf32> to vector<128xf32>
    %304 = vector.shape_cast %303 : vector<128xf32> to vector<1x128xf32>
    %305 = vector.broadcast %11 : f32 to vector<1x128xf32>
    %306 = arith.addf %304, %305 : vector<1x128xf32>
    %cst_95 = arith.constant 5.000000e-01 : f32
    %307 = vector.broadcast %cst_95 : f32 to vector<1x128xf32>
    %308 = arith.mulf %307, %306 : vector<1x128xf32>
    %309 = math.tanh %308 : vector<1x128xf32>
    %cst_96 = arith.constant 1.000000e+00 : f32
    %310 = vector.broadcast %cst_96 : f32 to vector<1x128xf32>
    %311 = arith.addf %309, %310 : vector<1x128xf32>
    %cst_97 = arith.constant 5.000000e-01 : f32
    %312 = vector.broadcast %cst_97 : f32 to vector<1x128xf32>
    %313 = arith.mulf %312, %311 : vector<1x128xf32>
    %314 = arith.mulf %313, %291 : vector<1x128xf32>
    %cst_98 = arith.constant 5.000000e-06 : f32
    %315 = vector.broadcast %cst_98 : f32 to vector<1x128xf32>
    %316 = arith.mulf %315, %314 : vector<1x128xf32>
    %317 = arith.subf %290, %316 : vector<1x128xf32>
    %318 = arith.mulf %314, %317 : vector<1x128xf32>
    %319 = arith.addf %284, %318 : vector<1x128xf32>
    %c0_99 = arith.constant 0 : index
    %c8 = arith.constant 8 : index
    %c0_100 = arith.constant 0 : index
    %320 = vector.load %arg1[%c0_99, %c8, %c0_100] : memref<1x10x128xf32, #tpu.memory_space<vmem>>, vector<1x1x128xf32>
    %321 = vector.shape_cast %320 : vector<1x1x128xf32> to vector<1x128xf32>
    %322 = arith.addf %290, %321 : vector<1x128xf32>
    %cst_101 = arith.constant 2.500000e-07 : f32
    %323 = vector.broadcast %cst_101 : f32 to vector<1x128xf32>
    %324 = arith.mulf %323, %314 : vector<1x128xf32>
    %325 = arith.subf %322, %324 : vector<1x128xf32>
    %326 = arith.subf %291, %314 : vector<1x128xf32>
    %cst_102 = arith.constant 5.000000e-06 : f32
    %327 = vector.broadcast %cst_102 : f32 to vector<1x128xf32>
    %328 = arith.mulf %327, %326 : vector<1x128xf32>
    %329 = arith.subf %325, %328 : vector<1x128xf32>
    %330 = arith.mulf %326, %329 : vector<1x128xf32>
    %331 = arith.addf %319, %330 : vector<1x128xf32>
    %cst_103 = arith.constant 6.020000e+05 : f32
    %332 = vector.broadcast %cst_103 : f32 to vector<1x128xf32>
    %333 = arith.subf %332, %331 : vector<1x128xf32>
    %c0_104 = arith.constant 0 : index
    %c0_105 = arith.constant 0 : index
    %c0_106 = arith.constant 0 : index
    %334 = vector.load %arg6[%c0_104, %c0_105, %c0_106] : memref<1x1x128xf32, #tpu.memory_space<vmem>>, vector<1x1x128xf32>
    %335 = vector.shape_cast %334 : vector<1x1x128xf32> to vector<1x128xf32>
    %336 = vector.shape_cast %333 : vector<1x128xf32> to vector<1x1x128xf32>
    tpu.vector_store %arg6[%c0_104, %c0_105, %c0_106], %336 {strides = array<i32>} : memref<1x1x128xf32, #tpu.memory_space<vmem>>, vector<1x1x128xf32>,
    return
  }
  func.func @transform_0(%arg0: i32) -> (i32, i32, i32) {
    %c0_i32 = arith.constant 0 : i32
    %c0_i32_0 = arith.constant 0 : i32
    %c0_i32_1 = arith.constant 0 : i32
    return %arg0, %c0_i32, %c0_i32_0 : i32, i32, i32
  }
  func.func @transform_1(%arg0: i32) -> (i32, i32) {
    %c0_i32 = arith.constant 0 : i32
    %c0_i32_0 = arith.constant 0 : i32
    %c0_i32_1 = arith.constant 0 : i32
    return %c0_i32, %c0_i32_0 : i32, i32
  }
  func.func @transform_2(%arg0: i32) -> (i32, i32) {
    %c0_i32 = arith.constant 0 : i32
    %c0_i32_0 = arith.constant 0 : i32
    %c0_i32_1 = arith.constant 0 : i32
    return %c0_i32, %c0_i32_0 : i32, i32
  }
  func.func @transform_3(%arg0: i32) -> (i32, i32) {
    %c0_i32 = arith.constant 0 : i32
    %c0_i32_0 = arith.constant 0 : i32
    %c0_i32_1 = arith.constant 0 : i32
    return %c0_i32, %c0_i32_0 : i32, i32
  }
  func.func @transform_4(%arg0: i32) -> (i32, i32) {
    %c0_i32 = arith.constant 0 : i32
    %c0_i32_0 = arith.constant 0 : i32
    %c0_i32_1 = arith.constant 0 : i32
    return %c0_i32, %c0_i32_0 : i32, i32
  }
  func.func @transform_5(%arg0: i32) -> (i32, i32, i32) {
    %c0_i32 = arith.constant 0 : i32
    %c0_i32_0 = arith.constant 0 : i32
    %c0_i32_1 = arith.constant 0 : i32
    return %arg0, %c0_i32, %c0_i32_0 : i32, i32, i32
  }
}

</mosaic_0001>

<llo_original>
// kernel: tpu_custom_call.1
$region0: #{tpu_custom_call.1}
  #allocation0 [shape = 'u32[]', space=smem, size = 0x4, offset = 0x4, fixed_abs, tag = 'smem constant byte address 0x4 - core index']
  #allocation1 [shape = 'u32[144,128]{1,0:T(1,128)}', space=vmem, size = 0x12000, scoped, tag = 'internal scratch']
  #allocation2 [shape = 'f32[1,1]{1,0:T(1,128)S(6)}', space=smem, size = 0x200, scoped, tag = 'scoped memory for tpu_custom_call.1']
  %s0 = inlined_call_operand.vmem [shape: f32[1,10,128], index: 0, kind: input, shape index: {}]
  %s1 = inlined_call_operand.vmem [shape: f32[32,2], index: 1, kind: input, shape index: {}]
  %s2 = inlined_call_operand.vmem [shape: f32[32,1], index: 2, kind: input, shape index: {}]
  %s3 = inlined_call_operand.vmem [shape: f32[32,1], index: 3, kind: input, shape index: {}]
  %s4 = inlined_call_operand.<no memory space> [shape: f32[1,1], index: 4, kind: input, shape index: {}]
  %s5 = inlined_call_operand.hbm [shape: f32[1,1,128], index: 5, kind: output, shape index: {}]
  %s6 = sld [smem:[#allocation0]]
  $region30: #{tpu_custom_call.1} parent=0
    _
  %s8 = ssub.s32 1, %s6
  %s9 = scalar_select 0, %s8, %s6
  %10 = sst [smem:[#allocation2]] %s4
  $region1: #{tpu_custom_call.1} parent=0
    #allocation3 [shape = 'u8[512]{0}', space=vmem, size = 0x400, scoped, tag = 'output window, operand 0, single buffered']
    #allocation4 [shape = 's32[1]{0}', space=sflag, size = 0x4, scoped, tag = 'scoped memory for tpu_custom_call.1']
    %11 = vsyncpa [#allocation4], 0
    // Predicated region
    $region2: #{tpu_custom_call.1} parent=1 // pred_check
      _
    $region3: #{tpu_custom_call.1} parent=1 // pred_check_branch
      %13 = sbr.rel (0) target = $region5
    $region4: #{tpu_custom_call.1} parent=1 // pred_region
      _
    $region5: #{tpu_custom_call.1} parent=1 // pred_fallthru
      _
    // Predicated region
    $region6: #{tpu_custom_call.1} parent=1 // pred_check
      _
    $region7: #{tpu_custom_call.1} parent=1 // pred_check_branch
      %15 = sbr.rel (0) target = $region9
    $region8: #{tpu_custom_call.1} parent=1 // pred_region
      _
    $region9: #{tpu_custom_call.1} parent=1 // pred_fallthru
      _
    // Predicated region
    $region10: #{tpu_custom_call.1} parent=1 // pred_check
      _
    $region11: #{tpu_custom_call.1} parent=1 // pred_check_branch
      %17 = sbr.rel (0) target = $region13
    $region12: #{tpu_custom_call.1} parent=1 // pred_region
      _
    $region13: #{tpu_custom_call.1} parent=1 // pred_fallthru
      _
    // Predicated region
    $region14: #{tpu_custom_call.1} parent=1 // pred_check
      _
    $region15: #{tpu_custom_call.1} parent=1 // pred_check_branch
      %19 = sbr.rel (0) target = $region17
    $region16: #{tpu_custom_call.1} parent=1 // pred_region
      _
    $region17: #{tpu_custom_call.1} parent=1 // pred_fallthru
      _
    // Predicated region
    $region18: #{tpu_custom_call.1} parent=1 // pred_check
      _
    $region19: #{tpu_custom_call.1} parent=1 // pred_check_branch
      %21 = sbr.rel (0) target = $region21
    $region20: #{tpu_custom_call.1} parent=1 // pred_region
      _
    $region21: #{tpu_custom_call.1} parent=1 // pred_fallthru
      _
    %v22 = vld [vmem:[%s1] sm:$0xff]
    %v23 = vld [vmem:[%s1 + $0x8] sm:$0xff]
    %v24 = vld [vmem:[%s1 + $0x10] sm:$0xff]
    %v25 = vld [vmem:[%s1 + $0x18] sm:$0xff]
    %27 = vset.pattern.permute.xlu0 1
    %28 = vperm.xlu0 %27, %v22
    %v29 = vpop.permute.xlu0 %28
    %32 = vset.pattern.permute.xlu0 1
    %33 = vperm.xlu0 %32, %v23
    %v34 = vpop.permute.xlu0 %33
    %37 = vset.pattern.permute.xlu0 1
    %38 = vperm.xlu0 %37, %v24
    %v39 = vpop.permute.xlu0 %38
    %42 = vset.pattern.permute.xlu0 1
    %43 = vperm.xlu0 %42, %v25
    %v44 = vpop.permute.xlu0 %43
    %v46 = vld [vmem:[%s2] sm:$0xff]
    %v47 = vld [vmem:[%s2 + $0x8] sm:$0xff]
    %v48 = vld [vmem:[%s2 + $0x10] sm:$0xff]
    %v49 = vld [vmem:[%s2 + $0x18] sm:$0xff]
    %v50 = vld [vmem:[%s3] sm:$0xff]
    %v51 = vld [vmem:[%s3 + $0x8] sm:$0xff]
    %v52 = vld [vmem:[%s3 + $0x10] sm:$0xff]
    %v53 = vld [vmem:[%s3 + $0x18] sm:$0xff]
    %55 = vset.pattern.permute.xlu0 0
    %56 = vperm.xlu0 %55, %v50
    %v57 = vpop.permute.xlu0 %56
    %60 = vset.pattern.permute.xlu0 0
    %61 = vperm.xlu0 %60, %v51
    %v62 = vpop.permute.xlu0 %61
    %65 = vset.pattern.permute.xlu0 0
    %66 = vperm.xlu0 %65, %v52
    %v67 = vpop.permute.xlu0 %66
    %70 = vset.pattern.permute.xlu0 0
    %71 = vperm.xlu0 %70, %v53
    %v72 = vpop.permute.xlu0 %71
    %s74 = sld [smem:[#allocation2]]
    %v75 = vmul.f32 %v22, 0.0
    %v76 = vmul.f32 %v23, 0.0
    %v77 = vmul.f32 %v24, 0.0
    %v78 = vmul.f32 %v25, 0.0
    %v79 = vadd.f32 %v75, %v46
    %v80 = vadd.f32 %v76, %v47
    %v81 = vadd.f32 %v77, %v48
    %v82 = vadd.f32 %v78, %v49
    %84 = vset.pattern.permute.xlu0 0
    %85 = vperm.xlu0 %84, %v79
    %v86 = vpop.permute.xlu0 %85
    %89 = vset.pattern.permute.xlu0 0
    %90 = vperm.xlu0 %89, %v80
    %v91 = vpop.permute.xlu0 %90
    %94 = vset.pattern.permute.xlu0 0
    %95 = vperm.xlu0 %94, %v81
    %v96 = vpop.permute.xlu0 %95
    %99 = vset.pattern.permute.xlu0 0
    %100 = vperm.xlu0 %99, %v82
    %v101 = vpop.permute.xlu0 %100
    %v103 = vadd.f32 %v29, %v86
    %v104 = vadd.f32 %v34, %v91
    %v105 = vadd.f32 %v39, %v96
    %v106 = vadd.f32 %v44, %v101
    %v107 = vtanh.pop %v103
    %v108 = vtanh.pop %v104
    %v109 = vtanh.pop %v105
    %v110 = vtanh.pop %v106
    %v111 = vmul.f32 %v107, %v57
    %v112 = vmul.f32 %v108, %v62
    %v113 = vmul.f32 %v109, %v67
    %v114 = vmul.f32 %v110, %v72
    %v115 = vadd.f32 %v111, %v112
    %v116 = vadd.f32 %v115, %v113
    %v117 = vadd.f32 %v116, %v114
    %v118 = vrot.slane %v117, 4
    %v119 = vadd.f32 %v117, %v118
    %v120 = vrot.slane %v119, 2
    %v121 = vadd.f32 %v119, %v120
    %v122 = vrot.slane %v121, 1
    %v123 = vadd.f32 %v121, %v122
    %v124 = vstv %s74
    %v125 = vadd.f32 %v123, %v124
    %v126 = vmul.f32 %v125, 0.5
    %v127 = vtanh.pop %v126
    %v128 = vadd.f32 %v127, 1.0
    %v129 = vmul.f32 %v128, 0.5
    %v130 = vmul.f32 %v129, 3500.0
    %v131 = vmul.f32 %v130, 5e-06
    %v132 = vsub.f32 172.0, %v131
    %v133 = vmul.f32 %v130, %v132
    %v134 = vadd.f32 %v133, 0.0
    %v135 = vld [vmem:[%s0] sm:$0x1]
    %v136 = vadd.f32 %v135, 172.0
    %v137 = vmul.f32 %v130, 2.5e-07
    %v138 = vsub.f32 %v136, %v137
    %v139 = vsub.f32 3500.0, %v130
    %v140 = vmul.f32 %v139, 0.00028571428
    %v141 = vmul.f32 %v22, 0.1
    %v142 = vmul.f32 %v23, 0.1
    %v143 = vmul.f32 %v24, 0.1
    %v144 = vmul.f32 %v25, 0.1
    %v145 = vadd.f32 %v141, %v46
    %v146 = vadd.f32 %v142, %v47
    %v147 = vadd.f32 %v143, %v48
    %v148 = vadd.f32 %v144, %v49
    %v149 = vmul.f32 %v29, %v140
    %v150 = vmul.f32 %v34, %v140
    %v151 = vmul.f32 %v39, %v140
    %v152 = vmul.f32 %v44, %v140
    %154 = vset.pattern.permute.xlu0 0
    %155 = vperm.xlu0 %154, %v145
    %v156 = vpop.permute.xlu0 %155
    %159 = vset.pattern.permute.xlu0 0
    %160 = vperm.xlu0 %159, %v146
    %v161 = vpop.permute.xlu0 %160
    %164 = vset.pattern.permute.xlu0 0
    %165 = vperm.xlu0 %164, %v147
    %v166 = vpop.permute.xlu0 %165
    %169 = vset.pattern.permute.xlu0 0
    %170 = vperm.xlu0 %169, %v148
    %v171 = vpop.permute.xlu0 %170
    %v173 = vadd.f32 %v149, %v156
    %v174 = vadd.f32 %v150, %v161
    %v175 = vadd.f32 %v151, %v166
    %v176 = vadd.f32 %v152, %v171
    %v177 = vtanh.pop %v173
    %v178 = vtanh.pop %v174
    %v179 = vtanh.pop %v175
    %v180 = vtanh.pop %v176
    %v181 = vmul.f32 %v177, %v57
    %v182 = vmul.f32 %v178, %v62
    %v183 = vmul.f32 %v179, %v67
    %v184 = vmul.f32 %v180, %v72
    %v185 = vadd.f32 %v181, %v182
    %v186 = vadd.f32 %v185, %v183
    %v187 = vadd.f32 %v186, %v184
    %v188 = vrot.slane %v187, 4
    %v189 = vadd.f32 %v187, %v188
    %v190 = vrot.slane %v189, 2
    %v191 = vadd.f32 %v189, %v190
    %v192 = vrot.slane %v191, 1
    %v193 = vadd.f32 %v191, %v192
    %v194 = vadd.f32 %v193, %v124
    %v195 = vmul.f32 %v194, 0.5
    %v196 = vtanh.pop %v195
    %v197 = vadd.f32 %v196, 1.0
    %v198 = vmul.f32 %v197, 0.5
    %v199 = vmul.f32 %v198, %v139
    %v200 = vmul.f32 %v199, 5e-06
    %v201 = vsub.f32 %v138, %v200
    %v202 = vmul.f32 %v199, %v201
    %v203 = vadd.f32 %v134, %v202
    %v204 = vld [vmem:[%s0 + $0x1] sm:$0x1]
    %v205 = vadd.f32 %v138, %v204
    %v206 = vmul.f32 %v199, 2.5e-07
    %v207 = vsub.f32 %v205, %v206
    %v208 = vsub.f32 %v139, %v199
    %v209 = vmul.f32 %v208, 0.00028571428
    %v210 = vmul.f32 %v22, 0.2
    %v211 = vmul.f32 %v23, 0.2
    %v212 = vmul.f32 %v24, 0.2
    %v213 = vmul.f32 %v25, 0.2
    %v214 = vadd.f32 %v210, %v46
    %v215 = vadd.f32 %v211, %v47
    %v216 = vadd.f32 %v212, %v48
    %v217 = vadd.f32 %v213, %v49
    %v218 = vmul.f32 %v29, %v209
    %v219 = vmul.f32 %v34, %v209
    %v220 = vmul.f32 %v39, %v209
    %v221 = vmul.f32 %v44, %v209
    %223 = vset.pattern.permute.xlu0 0
    %224 = vperm.xlu0 %223, %v214
    %v225 = vpop.permute.xlu0 %224
    %228 = vset.pattern.permute.xlu0 0
    %229 = vperm.xlu0 %228, %v215
    %v230 = vpop.permute.xlu0 %229
    %233 = vset.pattern.permute.xlu0 0
    %234 = vperm.xlu0 %233, %v216
    %v235 = vpop.permute.xlu0 %234
    %238 = vset.pattern.permute.xlu0 0
    %239 = vperm.xlu0 %238, %v217
    %v240 = vpop.permute.xlu0 %239
    %v242 = vadd.f32 %v218, %v225
    %v243 = vadd.f32 %v219, %v230
    %v244 = vadd.f32 %v220, %v235
    %v245 = vadd.f32 %v221, %v240
    %v246 = vtanh.pop %v242
    %v247 = vtanh.pop %v243
    %v248 = vtanh.pop %v244
    %v249 = vtanh.pop %v245
    %v250 = vmul.f32 %v246, %v57
    %v251 = vmul.f32 %v247, %v62
    %v252 = vmul.f32 %v248, %v67
    %v253 = vmul.f32 %v249, %v72
    %v254 = vadd.f32 %v250, %v251
    %v255 = vadd.f32 %v254, %v252
    %v256 = vadd.f32 %v255, %v253
    %v257 = vrot.slane %v256, 4
    %v258 = vadd.f32 %v256, %v257
    %v259 = vrot.slane %v258, 2
    %v260 = vadd.f32 %v258, %v259
    %v261 = vrot.slane %v260, 1
    %v262 = vadd.f32 %v260, %v261
    %v263 = vadd.f32 %v262, %v124
    %v264 = vmul.f32 %v263, 0.5
    %v265 = vtanh.pop %v264
    %v266 = vadd.f32 %v265, 1.0
    %v267 = vmul.f32 %v266, 0.5
    %v268 = vmul.f32 %v267, %v208
    %v269 = vmul.f32 %v268, 5e-06
    %v270 = vsub.f32 %v207, %v269
    %v271 = vmul.f32 %v268, %v270
    %v272 = vadd.f32 %v203, %v271
    %v273 = vld [vmem:[%s0 + $0x2] sm:$0x1]
    %v274 = vadd.f32 %v207, %v273
    %v275 = vmul.f32 %v268, 2.5e-07
    %v276 = vsub.f32 %v274, %v275
    %v277 = vsub.f32 %v208, %v268
    %v278 = vmul.f32 %v277, 0.00028571428
    %v279 = vmul.f32 %v22, 0.3
    %v280 = vmul.f32 %v23, 0.3
    %v281 = vmul.f32 %v24, 0.3
    %v282 = vmul.f32 %v25, 0.3
    %v283 = vadd.f32 %v279, %v46
    %v284 = vadd.f32 %v280, %v47
    %v285 = vadd.f32 %v281, %v48
    %v286 = vadd.f32 %v282, %v49
    %v287 = vmul.f32 %v29, %v278
    %v288 = vmul.f32 %v34, %v278
    %v289 = vmul.f32 %v39, %v278
    %v290 = vmul.f32 %v44, %v278
    %292 = vset.pattern.permute.xlu0 0
    %293 = vperm.xlu0 %292, %v283
    %v294 = vpop.permute.xlu0 %293
    %297 = vset.pattern.permute.xlu0 0
    %298 = vperm.xlu0 %297, %v284
    %v299 = vpop.permute.xlu0 %298
    %302 = vset.pattern.permute.xlu0 0
    %303 = vperm.xlu0 %302, %v285
    %v304 = vpop.permute.xlu0 %303
    %307 = vset.pattern.permute.xlu0 0
    %308 = vperm.xlu0 %307, %v286
    %v309 = vpop.permute.xlu0 %308
    %v311 = vadd.f32 %v287, %v294
    %v312 = vadd.f32 %v288, %v299
    %v313 = vadd.f32 %v289, %v304
    %v314 = vadd.f32 %v290, %v309
    %v315 = vtanh.pop %v311
    %v316 = vtanh.pop %v312
    %v317 = vtanh.pop %v313
    %v318 = vtanh.pop %v314
    %v319 = vmul.f32 %v315, %v57
    %v320 = vmul.f32 %v316, %v62
    %v321 = vmul.f32 %v317, %v67
    %v322 = vmul.f32 %v318, %v72
    %v323 = vadd.f32 %v319, %v320
    %v324 = vadd.f32 %v323, %v321
    %v325 = vadd.f32 %v324, %v322
    %v326 = vrot.slane %v325, 4
    %v327 = vadd.f32 %v325, %v326
    %v328 = vrot.slane %v327, 2
    %v329 = vadd.f32 %v327, %v328
    %v330 = vrot.slane %v329, 1
    %v331 = vadd.f32 %v329, %v330
    %v332 = vadd.f32 %v331, %v124
    %v333 = vmul.f32 %v332, 0.5
    %v334 = vtanh.pop %v333
    %v335 = vadd.f32 %v334, 1.0
    %v336 = vmul.f32 %v335, 0.5
    %v337 = vmul.f32 %v336, %v277
    %v338 = vmul.f32 %v337, 5e-06
    %v339 = vsub.f32 %v276, %v338
    %v340 = vmul.f32 %v337, %v339
    %v341 = vadd.f32 %v272, %v340
    %v342 = vld [vmem:[%s0 + $0x3] sm:$0x1]
    %v343 = vadd.f32 %v276, %v342
    %v344 = vmul.f32 %v337, 2.5e-07
    %v345 = vsub.f32 %v343, %v344
    %v346 = vsub.f32 %v277, %v337
    %v347 = vmul.f32 %v346, 0.00028571428
    %v348 = vmul.f32 %v22, 0.4
    %v349 = vmul.f32 %v23, 0.4
    %v350 = vmul.f32 %v24, 0.4
    %v351 = vmul.f32 %v25, 0.4
    %v352 = vadd.f32 %v348, %v46
    %v353 = vadd.f32 %v349, %v47
    %v354 = vadd.f32 %v350, %v48
    %v355 = vadd.f32 %v351, %v49
    %v356 = vmul.f32 %v29, %v347
    %v357 = vmul.f32 %v34, %v347
    %v358 = vmul.f32 %v39, %v347
    %v359 = vmul.f32 %v44, %v347
    %361 = vset.pattern.permute.xlu0 0
    %362 = vperm.xlu0 %361, %v352
    %v363 = vpop.permute.xlu0 %362
    %366 = vset.pattern.permute.xlu0 0
    %367 = vperm.xlu0 %366, %v353
    %v368 = vpop.permute.xlu0 %367
    %371 = vset.pattern.permute.xlu0 0
    %372 = vperm.xlu0 %371, %v354
    %v373 = vpop.permute.xlu0 %372
    %376 = vset.pattern.permute.xlu0 0
    %377 = vperm.xlu0 %376, %v355
    %v378 = vpop.permute.xlu0 %377
    %v380 = vadd.f32 %v356, %v363
    %v381 = vadd.f32 %v357, %v368
    %v382 = vadd.f32 %v358, %v373
    %v383 = vadd.f32 %v359, %v378
    %v384 = vtanh.pop %v380
    %v385 = vtanh.pop %v381
    %v386 = vtanh.pop %v382
    %v387 = vtanh.pop %v383
    %v388 = vmul.f32 %v384, %v57
    %v389 = vmul.f32 %v385, %v62
    %v390 = vmul.f32 %v386, %v67
    %v391 = vmul.f32 %v387, %v72
    %v392 = vadd.f32 %v388, %v389
    %v393 = vadd.f32 %v392, %v390
    %v394 = vadd.f32 %v393, %v391
    %v395 = vrot.slane %v394, 4
    %v396 = vadd.f32 %v394, %v395
    %v397 = vrot.slane %v396, 2
    %v398 = vadd.f32 %v396, %v397
    %v399 = vrot.slane %v398, 1
    %v400 = vadd.f32 %v398, %v399
    %v401 = vadd.f32 %v400, %v124
    %v402 = vmul.f32 %v401, 0.5
    %v403 = vtanh.pop %v402
    %v404 = vadd.f32 %v403, 1.0
    %v405 = vmul.f32 %v404, 0.5
    %v406 = vmul.f32 %v405, %v346
    %v407 = vmul.f32 %v406, 5e-06
    %v408 = vsub.f32 %v345, %v407
    %v409 = vmul.f32 %v406, %v408
    %v410 = vadd.f32 %v341, %v409
    %v411 = vld [vmem:[%s0 + $0x4] sm:$0x1]
    %v412 = vadd.f32 %v345, %v411
    %v413 = vmul.f32 %v406, 2.5e-07
    %v414 = vsub.f32 %v412, %v413
    %v415 = vsub.f32 %v346, %v406
    %v416 = vmul.f32 %v415, 0.00028571428
    %v417 = vmul.f32 %v22, 0.5
    %v418 = vmul.f32 %v23, 0.5
    %v419 = vmul.f32 %v24, 0.5
    %v420 = vmul.f32 %v25, 0.5
    %v421 = vadd.f32 %v417, %v46
    %v422 = vadd.f32 %v418, %v47
    %v423 = vadd.f32 %v419, %v48
    %v424 = vadd.f32 %v420, %v49
    %v425 = vmul.f32 %v29, %v416
    %v426 = vmul.f32 %v34, %v416
    %v427 = vmul.f32 %v39, %v416
    %v428 = vmul.f32 %v44, %v416
    %430 = vset.pattern.permute.xlu0 0
    %431 = vperm.xlu0 %430, %v421
    %v432 = vpop.permute.xlu0 %431
    %435 = vset.pattern.permute.xlu0 0
    %436 = vperm.xlu0 %435, %v422
    %v437 = vpop.permute.xlu0 %436
    %440 = vset.pattern.permute.xlu0 0
    %441 = vperm.xlu0 %440, %v423
    %v442 = vpop.permute.xlu0 %441
    %445 = vset.pattern.permute.xlu0 0
    %446 = vperm.xlu0 %445, %v424
    %v447 = vpop.permute.xlu0 %446
    %v449 = vadd.f32 %v425, %v432
    %v450 = vadd.f32 %v426, %v437
    %v451 = vadd.f32 %v427, %v442
    %v452 = vadd.f32 %v428, %v447
    %v453 = vtanh.pop %v449
    %v454 = vtanh.pop %v450
    %v455 = vtanh.pop %v451
    %v456 = vtanh.pop %v452
    %v457 = vmul.f32 %v453, %v57
    %v458 = vmul.f32 %v454, %v62
    %v459 = vmul.f32 %v455, %v67
    %v460 = vmul.f32 %v456, %v72
    %v461 = vadd.f32 %v457, %v458
    %v462 = vadd.f32 %v461, %v459
    %v463 = vadd.f32 %v462, %v460
    %v464 = vrot.slane %v463, 4
    %v465 = vadd.f32 %v463, %v464
    %v466 = vrot.slane %v465, 2
    %v467 = vadd.f32 %v465, %v466
    %v468 = vrot.slane %v467, 1
    %v469 = vadd.f32 %v467, %v468
    %v470 = vadd.f32 %v469, %v124
    %v471 = vmul.f32 %v470, 0.5
    %v472 = vtanh.pop %v471
    %v473 = vadd.f32 %v472, 1.0
    %v474 = vmul.f32 %v473, 0.5
    %v475 = vmul.f32 %v474, %v415
    %v476 = vmul.f32 %v475, 5e-06
    %v477 = vsub.f32 %v414, %v476
    %v478 = vmul.f32 %v475, %v477
    %v479 = vadd.f32 %v410, %v478
    %v480 = vld [vmem:[%s0 + $0x5] sm:$0x1]
    %v481 = vadd.f32 %v414, %v480
    %v482 = vmul.f32 %v475, 2.5e-07
    %v483 = vsub.f32 %v481, %v482
    %v484 = vsub.f32 %v415, %v475
    %v485 = vmul.f32 %v484, 0.00028571428
    %v486 = vmul.f32 %v22, 0.6
    %v487 = vmul.f32 %v23, 0.6
    %v488 = vmul.f32 %v24, 0.6
    %v489 = vmul.f32 %v25, 0.6
    %v490 = vadd.f32 %v486, %v46
    %v491 = vadd.f32 %v487, %v47
    %v492 = vadd.f32 %v488, %v48
    %v493 = vadd.f32 %v489, %v49
    %v494 = vmul.f32 %v29, %v485
    %v495 = vmul.f32 %v34, %v485
    %v496 = vmul.f32 %v39, %v485
    %v497 = vmul.f32 %v44, %v485
    %499 = vset.pattern.permute.xlu0 0
    %500 = vperm.xlu0 %499, %v490
    %v501 = vpop.permute.xlu0 %500
    %504 = vset.pattern.permute.xlu0 0
    %505 = vperm.xlu0 %504, %v491
    %v506 = vpop.permute.xlu0 %505
    %509 = vset.pattern.permute.xlu0 0
    %510 = vperm.xlu0 %509, %v492
    %v511 = vpop.permute.xlu0 %510
    %514 = vset.pattern.permute.xlu0 0
    %515 = vperm.xlu0 %514, %v493
    %v516 = vpop.permute.xlu0 %515
    %v518 = vadd.f32 %v494, %v501
    %v519 = vadd.f32 %v495, %v506
    %v520 = vadd.f32 %v496, %v511
    %v521 = vadd.f32 %v497, %v516
    %v522 = vtanh.pop %v518
    %v523 = vtanh.pop %v519
    %v524 = vtanh.pop %v520
    %v525 = vtanh.pop %v521
    %v526 = vmul.f32 %v522, %v57
    %v527 = vmul.f32 %v523, %v62
    %v528 = vmul.f32 %v524, %v67
    %v529 = vmul.f32 %v525, %v72
    %v530 = vadd.f32 %v526, %v527
    %v531 = vadd.f32 %v530, %v528
    %v532 = vadd.f32 %v531, %v529
    %v533 = vrot.slane %v532, 4
    %v534 = vadd.f32 %v532, %v533
    %v535 = vrot.slane %v534, 2
    %v536 = vadd.f32 %v534, %v535
    %v537 = vrot.slane %v536, 1
    %v538 = vadd.f32 %v536, %v537
    %v539 = vadd.f32 %v538, %v124
    %v540 = vmul.f32 %v539, 0.5
    %v541 = vtanh.pop %v540
    %v542 = vadd.f32 %v541, 1.0
    %v543 = vmul.f32 %v542, 0.5
    %v544 = vmul.f32 %v543, %v484
    %v545 = vmul.f32 %v544, 5e-06
    %v546 = vsub.f32 %v483, %v545
    %v547 = vmul.f32 %v544, %v546
    %v548 = vadd.f32 %v479, %v547
    %v549 = vld [vmem:[%s0 + $0x6] sm:$0x1]
    %v550 = vadd.f32 %v483, %v549
    %v551 = vmul.f32 %v544, 2.5e-07
    %v552 = vsub.f32 %v550, %v551
    %v553 = vsub.f32 %v484, %v544
    %v554 = vmul.f32 %v553, 0.00028571428
    %v555 = vmul.f32 %v22, 0.7
    %v556 = vmul.f32 %v23, 0.7
    %v557 = vmul.f32 %v24, 0.7
    %v558 = vmul.f32 %v25, 0.7
    %v559 = vadd.f32 %v555, %v46
    %v560 = vadd.f32 %v556, %v47
    %v561 = vadd.f32 %v557, %v48
    %v562 = vadd.f32 %v558, %v49
    %v563 = vmul.f32 %v29, %v554
    %v564 = vmul.f32 %v34, %v554
    %v565 = vmul.f32 %v39, %v554
    %v566 = vmul.f32 %v44, %v554
    %568 = vset.pattern.permute.xlu0 0
    %569 = vperm.xlu0 %568, %v559
    %v570 = vpop.permute.xlu0 %569
    %573 = vset.pattern.permute.xlu0 0
    %574 = vperm.xlu0 %573, %v560
    %v575 = vpop.permute.xlu0 %574
    %578 = vset.pattern.permute.xlu0 0
    %579 = vperm.xlu0 %578, %v561
    %v580 = vpop.permute.xlu0 %579
    %583 = vset.pattern.permute.xlu0 0
    %584 = vperm.xlu0 %583, %v562
    %v585 = vpop.permute.xlu0 %584
    %v587 = vadd.f32 %v563, %v570
    %v588 = vadd.f32 %v564, %v575
    %v589 = vadd.f32 %v565, %v580
    %v590 = vadd.f32 %v566, %v585
    %v591 = vtanh.pop %v587
    %v592 = vtanh.pop %v588
    %v593 = vtanh.pop %v589
    %v594 = vtanh.pop %v590
    %v595 = vmul.f32 %v591, %v57
    %v596 = vmul.f32 %v592, %v62
    %v597 = vmul.f32 %v593, %v67
    %v598 = vmul.f32 %v594, %v72
    %v599 = vadd.f32 %v595, %v596
    %v600 = vadd.f32 %v599, %v597
    %v601 = vadd.f32 %v600, %v598
    %v602 = vrot.slane %v601, 4
    %v603 = vadd.f32 %v601, %v602
    %v604 = vrot.slane %v603, 2
    %v605 = vadd.f32 %v603, %v604
    %v606 = vrot.slane %v605, 1
    %v607 = vadd.f32 %v605, %v606
    %v608 = vadd.f32 %v607, %v124
    %v609 = vmul.f32 %v608, 0.5
    %v610 = vtanh.pop %v609
    %v611 = vadd.f32 %v610, 1.0
    %v612 = vmul.f32 %v611, 0.5
    %v613 = vmul.f32 %v612, %v553
    %v614 = vmul.f32 %v613, 5e-06
    %v615 = vsub.f32 %v552, %v614
    %v616 = vmul.f32 %v613, %v615
    %v617 = vadd.f32 %v548, %v616
    %v618 = vld [vmem:[%s0 + $0x7] sm:$0x1]
    %v619 = vadd.f32 %v552, %v618
    %v620 = vmul.f32 %v613, 2.5e-07
    %v621 = vsub.f32 %v619, %v620
    %v622 = vsub.f32 %v553, %v613
    %v623 = vmul.f32 %v622, 0.00028571428
    %v624 = vmul.f32 %v22, 0.8
    %v625 = vmul.f32 %v23, 0.8
    %v626 = vmul.f32 %v24, 0.8
    %v627 = vmul.f32 %v25, 0.8
    %v628 = vadd.f32 %v624, %v46
    %v629 = vadd.f32 %v625, %v47
    %v630 = vadd.f32 %v626, %v48
    %v631 = vadd.f32 %v627, %v49
    %v632 = vmul.f32 %v29, %v623
    %v633 = vmul.f32 %v34, %v623
    %v634 = vmul.f32 %v39, %v623
    %v635 = vmul.f32 %v44, %v623
    %637 = vset.pattern.permute.xlu0 0
    %638 = vperm.xlu0 %637, %v628
    %v639 = vpop.permute.xlu0 %638
    %642 = vset.pattern.permute.xlu0 0
    %643 = vperm.xlu0 %642, %v629
    %v644 = vpop.permute.xlu0 %643
    %647 = vset.pattern.permute.xlu0 0
    %648 = vperm.xlu0 %647, %v630
    %v649 = vpop.permute.xlu0 %648
    %652 = vset.pattern.permute.xlu0 0
    %653 = vperm.xlu0 %652, %v631
    %v654 = vpop.permute.xlu0 %653
    %v656 = vadd.f32 %v632, %v639
    %v657 = vadd.f32 %v633, %v644
    %v658 = vadd.f32 %v634, %v649
    %v659 = vadd.f32 %v635, %v654
    %v660 = vtanh.pop %v656
    %v661 = vtanh.pop %v657
    %v662 = vtanh.pop %v658
    %v663 = vtanh.pop %v659
    %v664 = vmul.f32 %v660, %v57
    %v665 = vmul.f32 %v661, %v62
    %v666 = vmul.f32 %v662, %v67
    %v667 = vmul.f32 %v663, %v72
    %v668 = vadd.f32 %v664, %v665
    %v669 = vadd.f32 %v668, %v666
    %v670 = vadd.f32 %v669, %v667
    %v671 = vrot.slane %v670, 4
    %v672 = vadd.f32 %v670, %v671
    %v673 = vrot.slane %v672, 2
    %v674 = vadd.f32 %v672, %v673
    %v675 = vrot.slane %v674, 1
    %v676 = vadd.f32 %v674, %v675
    %v677 = vadd.f32 %v676, %v124
    %v678 = vmul.f32 %v677, 0.5
    %v679 = vtanh.pop %v678
    %v680 = vadd.f32 %v679, 1.0
    %v681 = vmul.f32 %v680, 0.5
    %v682 = vmul.f32 %v681, %v622
    %v683 = vmul.f32 %v682, 5e-06
    %v684 = vsub.f32 %v621, %v683
    %v685 = vmul.f32 %v682, %v684
    %v686 = vadd.f32 %v617, %v685
    %v687 = vld [vmem:[%s0 + $0x8] sm:$0x1]
    %v688 = vadd.f32 %v621, %v687
    %v689 = vmul.f32 %v682, 2.5e-07
    %v690 = vsub.f32 %v688, %v689
    %v691 = vsub.f32 %v622, %v682
    %v692 = vmul.f32 %v691, 5e-06
    %v693 = vsub.f32 %v690, %v692
    %v694 = vmul.f32 %v691, %v693
    %v695 = vadd.f32 %v686, %v694
    %v696 = vsub.f32 602000.0, %v695
    %697 = vst [vmem:[#allocation3] sm:$0x1] %v696
    // Predicated region
    $region22: #{tpu_custom_call.1} parent=1 // pred_check
      _
    $region23: #{tpu_custom_call.1} parent=1 // pred_check_branch
      %699 = sbr.rel (0) target = $region25
    $region24: #{tpu_custom_call.1} parent=1 // pred_region
      %s701 = ssub.s32 16, 16
      %702 = vsyncadd [#allocation4], %s701
      %s704 = sshll.u32 [#allocation3], 4
      %s705 = int_to_ptr.vmem [resolvable:$true] %s704
      %707 = dma.vmem_to_hbm [thread:$0]  %s705, 16, %s5, [#allocation4]
    $region25: #{tpu_custom_call.1} parent=1 // pred_fallthru
      _
    // Predicated region
    $region26: #{tpu_custom_call.1} parent=1 // pred_check
      _
    $region27: #{tpu_custom_call.1} parent=1 // pred_check_branch
      %709 = sbr.rel (0) target = $region29
    $region28: #{tpu_custom_call.1} parent=1 // pred_region
      %710 = dma.done [#allocation4], 16
    $region29: #{tpu_custom_call.1} parent=1 // pred_fallthru
      _
    %711 = vsyncpa [#allocation4], 1

</llo_original>
